<compile_context>
chip_gen: v5e
topology: v5e:2x2
jax: 0.10.0
libtpu: 0.0.40
codegen_flags: <defaults>
</compile_context>

<pallas_src>
import numpy as np
import jax
import jax.numpy as jnp
from jax.experimental import pallas as pl
from jax.experimental.pallas import tpu as pltpu

LN_EPS = 1e-5                 # PyTorch nn.LayerNorm default
DEFAULT_BATCH_TILE = 256      # v6e/v7x sweet spot; fine on v5e too


def _round_up(x, m):
    return (x + m - 1) // m * m


# ----------------------------------------------------------------------------
# Kernel
# ----------------------------------------------------------------------------
def actor_kernel(x_ref, wenc_ref, benc_ref, mavg_ref, mask_ref, g_ref, be_ref,
                 w1_ref, b1_ref, w2_ref, b2_ref, wp_ref, bp_ref, out_ref):
    f32 = jnp.float32

    # Fused encoders: one block-diagonal matmul (bf16 operands, f32 accumulate).
    h = jnp.dot(x_ref[...], wenc_ref[...], preferred_element_type=f32) + benc_ref[...]

    # Grouped LayerNorm via matmul with the group-averaging matrix (stays on
    # the MXU; no cross-lane XLU reductions, no reshapes). All in f32.
    mu = jnp.dot(h, mavg_ref[...], preferred_element_type=f32)
    d = h - mu
    var = jnp.dot(d * d, mavg_ref[...], preferred_element_type=f32)
    normed = d * jax.lax.rsqrt(var + LN_EPS) * g_ref[...] + be_ref[...]
    h = jnp.where(mask_ref[...] > 0.5, normed, h)        # gpu lanes: no LN
    h = jnp.maximum(h, 0.0).astype(jnp.bfloat16)         # ReLU on all encoders

    # Shared MLP.
    h1 = jnp.dot(h, w1_ref[...], preferred_element_type=f32) + b1_ref[...]
    h1 = jnp.maximum(h1, 0.0).astype(jnp.bfloat16)
    h2 = jnp.dot(h1, w2_ref[...], preferred_element_type=f32) + b2_ref[...]
    h2 = jnp.maximum(h2, 0.0).astype(jnp.bfloat16)

    # Priority head (lane-dense 128-wide padded output slab, f32).
    out_ref[...] = jnp.dot(h2, wp_ref[...], preferred_element_type=f32) + bp_ref[...]


# ----------------------------------------------------------------------------
# Parameter packing (done once on host at trace time, pure numpy)
# ----------------------------------------------------------------------------
def pack_params(params, out_pad):
    MJ = params["wp"].shape[1]
    N = params["wc"].shape[0]
    NG = params["wg"].shape[0]
    H = params["w2"].shape[0]
    Din = MJ * 5 + N + NG
    E = MJ * 16 + 16 + 32

    wj = np.asarray(params["wj"], np.float32)
    wc = np.asarray(params["wc"], np.float32)
    wg = np.asarray(params["wg"], np.float32)

    # Block-diagonal fused encoder weight (Din, E).
    wenc = np.zeros((Din, E), np.float32)
    for j in range(MJ):
        wenc[j * 5:(j + 1) * 5, j * 16:(j + 1) * 16] = wj
    wenc[MJ * 5:MJ * 5 + N, MJ * 16:MJ * 16 + 16] = wc
    wenc[MJ * 5 + N:, MJ * 16 + 16:] = wg

    def cat3(a, b, c):
        return np.concatenate([np.asarray(a, np.float32),
                               np.asarray(b, np.float32),
                               np.asarray(c, np.float32)], axis=1)

    benc = cat3(np.tile(np.asarray(params["bj"]), (1, MJ)), params["bc"], params["bg"])
    gamma = cat3(np.tile(np.asarray(params["gj"]), (1, MJ)), params["gc"],
                 np.ones((1, 32), np.float32))
    beta = cat3(np.tile(np.asarray(params["bej"]), (1, MJ)), params["bec"],
                np.zeros((1, 32), np.float32))
    mask = np.concatenate([np.ones((1, MJ * 16 + 16), np.float32),
                           np.zeros((1, 32), np.float32)], axis=1)

    # Group-averaging matrix: a 16x16 block of 1/16 per LN group, zeros for gpu.
    mavg = np.zeros((E, E), np.float32)
    for g in range(MJ + 1):
        mavg[g * 16:(g + 1) * 16, g * 16:(g + 1) * 16] = 1.0 / 16.0

    wp_pad = np.zeros((H, out_pad), np.float32)
    wp_pad[:, :MJ] = np.asarray(params["wp"], np.float32)
    bp_pad = np.zeros((1, out_pad), np.float32)
    bp_pad[:, :MJ] = np.asarray(params["bp"], np.float32)

    bf16 = jnp.bfloat16
    return [
        jnp.asarray(wenc, bf16), jnp.asarray(benc),
        jnp.asarray(mavg), jnp.asarray(mask), jnp.asarray(gamma), jnp.asarray(beta),
        jnp.asarray(np.asarray(params["w1"], np.float32), bf16),
        jnp.asarray(np.asarray(params["b1"], np.float32)),
        jnp.asarray(np.asarray(params["w2"], np.float32), bf16),
        jnp.asarray(np.asarray(params["b2"], np.float32)),
        jnp.asarray(wp_pad, bf16), jnp.asarray(bp_pad),
    ]


# ----------------------------------------------------------------------------
# Wrapper
# ----------------------------------------------------------------------------
def actor_forward(jobs, cluster, gpu_left, params, *, batch_tile=DEFAULT_BATCH_TILE):
    """jobs (B, MJ, 5); cluster (B, N); gpu_left (B, N, G) or (B, N*G)."""
    B, MJ, _ = jobs.shape
    N = cluster.shape[1]
    gpu_flat = gpu_left.reshape(B, -1)
    NG = gpu_flat.shape[1]
    H = params["w2"].shape[0]
    Din = MJ * 5 + N + NG
    E = MJ * 16 + 16 + 32
    P = _round_up(max(MJ, 128), 128)            # lane-dense padded head width

    # One batch-major activation tensor (the concat happens once, outside).
    x = jnp.concatenate([jobs.reshape(B, MJ * 5), cluster, gpu_flat],
                        axis=1).astype(jnp.float32)

    # Batch tiling. Either the single block equals the (padded) full array
    # (tiny B) or TB is 256 (multiple of 16 for bf16 sublane packing).
    TB = min(batch_tile, _round_up(B, 16))
    B_pad = _round_up(B, TB)
    if B_pad != B:
        x = jnp.zeros((B_pad, Din), jnp.float32).at[:B].set(x)
    x = x.astype(jnp.bfloat16)

    packed = pack_params(params, P)

    grid = (B_pad // TB,)
    in_specs = [pl.BlockSpec((TB, Din), lambda i: (i, 0))]
    # Weights: constant index_map -> stay VMEM-resident across batch tiles.
    in_specs += [pl.BlockSpec(p.shape, lambda i: (0, 0)) for p in packed]
    out_specs = pl.BlockSpec((TB, P), lambda i: (i, 0))

    flops = 2 * B_pad * (Din * E + 2 * E * E + E * H + H * H + H * P)
    bytes_accessed = int(x.size * 2
                         + sum(int(p.size) * p.dtype.itemsize for p in packed)
                         + B_pad * P * 4)
    cost = pl.CostEstimate(flops=int(flops),
                           transcendentals=int(B_pad * E),
                           bytes_accessed=bytes_accessed)

    out = pl.pallas_call(
        actor_kernel,
        grid=grid,
        in_specs=in_specs,
        out_specs=out_specs,
        out_shape=jax.ShapeDtypeStruct((B_pad, P), jnp.float32),
        compiler_params=pltpu.CompilerParams(
            dimension_semantics=("parallel",),      # megacore / 2nd TC on v7x
            vmem_limit_bytes=32 * 1024 * 1024),
        cost_estimate=cost,
    )(x, *packed)

    return out[:B, :MJ]


# ----------------------------------------------------------------------------
# Parameters + references
# ----------------------------------------------------------------------------
def init_params(key, num_nodes, num_gpus, max_jobs, hidden_dim):
    ks = jax.random.split(key, 10)
    s = 0.1

    def lin(k, fi, fo):
        return s * jax.random.normal(k, (fi, fo), jnp.float32)

    in_dim = 16 * max_jobs + 16 + 32
    H = hidden_dim
    return dict(
        wj=lin(ks[0], 5, 16), bj=s * jnp.ones((1, 16), jnp.float32),
        gj=1.0 + 0.1 * jax.random.normal(ks[6], (1, 16), jnp.float32),
        bej=0.1 * jax.random.normal(ks[7], (1, 16), jnp.float32),
        wc=lin(ks[1], num_nodes, 16), bc=s * jnp.ones((1, 16), jnp.float32),
        gc=1.0 + 0.1 * jax.random.normal(ks[8], (1, 16), jnp.float32),
        bec=0.1 * jax.random.normal(ks[9], (1, 16), jnp.float32),
        wg=lin(ks[2], num_nodes * num_gpus, 32), bg=s * jnp.ones((1, 32), jnp.float32),
        w1=lin(ks[3], in_dim, H), b1=s * jnp.ones((1, H), jnp.float32),
        w2=lin(ks[4], H, H), b2=s * jnp.ones((1, H), jnp.float32),
        wp=lin(ks[5], H, max_jobs), bp=s * jnp.ones((1, max_jobs), jnp.float32),
    )


def _ln(h, g, b):
    mu = jnp.mean(h, axis=-1, keepdims=True)
    var = jnp.mean((h - mu) ** 2, axis=-1, keepdims=True)
    return (h - mu) * jax.lax.rsqrt(var + LN_EPS) * g + b


def reference_forward_f32(jobs, cluster, gpu_left, params):
    """Exact PyTorch-semantics forward in f32."""
    B = jobs.shape[0]
    jf = jax.nn.relu(_ln(jobs.reshape(-1, 5) @ params["wj"] + params["bj"],
                         params["gj"], params["bej"])).reshape(B, -1)
    cf = jax.nn.relu(_ln(cluster @ params["wc"] + params["bc"],
                         params["gc"], params["bec"]))
    gf = jax.nn.relu(gpu_left.reshape(B, -1) @ params["wg"] + params["bg"])
    x = jnp.concatenate([jf, cf, gf], axis=1)
    h1 = jax.nn.relu(x @ params["w1"] + params["b1"])
    h2 = jax.nn.relu(h1 @ params["w2"] + params["b2"])
    return h2 @ params["wp"] + params["bp"]


def reference_forward_bf16(jobs, cluster, gpu_left, params):
    """Same ops, but bf16 matmul operands + f32 accumulation (the kernel's
    precision policy) — used for the tight numerical check."""
    bf16, f32 = jnp.bfloat16, jnp.float32

    def mm(a, w):
        return jnp.dot(a.astype(bf16), w.astype(bf16), preferred_element_type=f32)

    B = jobs.shape[0]
    jf = jax.nn.relu(_ln(mm(jobs.reshape(-1, 5), params["wj"]) + params["bj"],
                         params["gj"], params["bej"])).reshape(B, -1)
    cf = jax.nn.relu(_ln(mm(cluster, params["wc"]) + params["bc"],
                         params["gc"], params["bec"]))
    gf = jax.nn.relu(mm(gpu_left.reshape(B, -1), params["wg"]) + params["bg"])
    x = jnp.concatenate([jf, cf, gf], axis=1)
    h1 = jax.nn.relu(mm(x, params["w1"]) + params["b1"])
    h2 = jax.nn.relu(mm(h1, params["w2"]) + params["b2"])
    return mm(h2, params["wp"]) + params["bp"]


# ----------------------------------------------------------------------------
if __name__ == "__main__":
    num_nodes, num_gpus, max_jobs, hidden_dim = 4, 4, 8, 64
    B = 2

    key = jax.random.PRNGKey(0)
    kj, kc, kg, kp = jax.random.split(key, 4)

    jobs = jax.random.normal(kj, (B, max_jobs, 5), jnp.float32)
    cluster = jax.random.normal(kc, (B, num_nodes), jnp.float32)
    gpu_left = jax.random.normal(kg, (B, num_nodes, num_gpus), jnp.float32)

    params = init_params(kp, num_nodes, num_gpus, max_jobs, hidden_dim)

    out = actor_forward(jobs, cluster, gpu_left, params)
    out = jax.block_until_ready(out)
    assert out.shape == (B, max_jobs)

    # Tight check against a precision-matched (bf16 operands, f32 accumulate)
    # reference, plus a loose sanity check against the exact f32 semantics.
    ref_matched = reference_forward_bf16(jobs, cluster, gpu_left, params)
    np.testing.assert_allclose(np.asarray(out), np.asarray(ref_matched),
                               rtol=1e-2, atol=1e-2)
    ref_f32 = reference_forward_f32(jobs, cluster, gpu_left, params)
    np.testing.assert_allclose(np.asarray(out), np.asarray(ref_f32),
                               rtol=1e-1, atol=1e-1)

    print("KERNEL_OK")
</pallas_src>

<mosaic_0001>
module attributes {stable_mosaic.version = 11 : i64} {
  func.func @actor_kernel(%arg0: i32, %arg1: memref<16x60xbf16, #tpu.memory_space<vmem>>, %arg2: memref<60x176xbf16, #tpu.memory_space<vmem>>, %arg3: memref<1x176xf32, #tpu.memory_space<vmem>>, %arg4: memref<176x176xf32, #tpu.memory_space<vmem>>, %arg5: memref<1x176xf32, #tpu.memory_space<vmem>>, %arg6: memref<1x176xf32, #tpu.memory_space<vmem>>, %arg7: memref<1x176xf32, #tpu.memory_space<vmem>>, %arg8: memref<176x64xbf16, #tpu.memory_space<vmem>>, %arg9: memref<1x64xf32, #tpu.memory_space<vmem>>, %arg10: memref<64x64xbf16, #tpu.memory_space<vmem>>, %arg11: memref<1x64xf32, #tpu.memory_space<vmem>>, %arg12: memref<64x128xbf16, #tpu.memory_space<vmem>>, %arg13: memref<1x128xf32, #tpu.memory_space<vmem>>, %arg14: memref<16x128xf32, #tpu.memory_space<vmem>>) attributes {dimension_semantics = [#tpu.dimension_semantics<parallel>], iteration_bounds = array<i64: 1>, scalar_prefetch = 0 : i64, scratch_operands = 0 : i64, tpu.core_type = #tpu.core_type<tc>, window_params = [{transform_indices = @transform_0, window_bounds = array<i64: 16, 60>}, {pipeline_mode = #tpu.pipeline_mode<synchronous>, transform_indices = @transform_1, window_bounds = array<i64: 60, 176>}, {pipeline_mode = #tpu.pipeline_mode<synchronous>, transform_indices = @transform_2, window_bounds = array<i64: 1, 176>}, {pipeline_mode = #tpu.pipeline_mode<synchronous>, transform_indices = @transform_3, window_bounds = array<i64: 176, 176>}, {pipeline_mode = #tpu.pipeline_mode<synchronous>, transform_indices = @transform_4, window_bounds = array<i64: 1, 176>}, {pipeline_mode = #tpu.pipeline_mode<synchronous>, transform_indices = @transform_5, window_bounds = array<i64: 1, 176>}, {pipeline_mode = #tpu.pipeline_mode<synchronous>, transform_indices = @transform_6, window_bounds = array<i64: 1, 176>}, {pipeline_mode = #tpu.pipeline_mode<synchronous>, transform_indices = @transform_7, window_bounds = array<i64: 176, 64>}, {pipeline_mode = #tpu.pipeline_mode<synchronous>, transform_indices = @transform_8, window_bounds = array<i64: 1, 64>}, {pipeline_mode = #tpu.pipeline_mode<synchronous>, transform_indices = @transform_9, window_bounds = array<i64: 64, 64>}, {pipeline_mode = #tpu.pipeline_mode<synchronous>, transform_indices = @transform_10, window_bounds = array<i64: 1, 64>}, {pipeline_mode = #tpu.pipeline_mode<synchronous>, transform_indices = @transform_11, window_bounds = array<i64: 64, 128>}, {pipeline_mode = #tpu.pipeline_mode<synchronous>, transform_indices = @transform_12, window_bounds = array<i64: 1, 128>}, {transform_indices = @transform_13, window_bounds = array<i64: 16, 128>}]} {
    %c0 = arith.constant 0 : index
    %c0_0 = arith.constant 0 : index
    %0 = vector.load %arg1[%c0, %c0_0] : memref<16x60xbf16, #tpu.memory_space<vmem>>, vector<16x60xbf16>
    %c0_1 = arith.constant 0 : index
    %c0_2 = arith.constant 0 : index
    %1 = vector.load %arg2[%c0_1, %c0_2] : memref<60x176xbf16, #tpu.memory_space<vmem>>, vector<60x176xbf16>
    %cst = arith.constant dense<0.000000e+00> : vector<16x176xf32>
    %2 = tpu.matmul %0, %1, %cst {dimension_numbers = #tpu.dot_dimension_numbers<[1], [0], [0], [1], [0, 0, 1, 1], [], []>} : vector<16x60xbf16>, vector<60x176xbf16>, vector<16x176xf32> -> vector<16x176xf32>
    %c0_3 = arith.constant 0 : index
    %c0_4 = arith.constant 0 : index
    %3 = vector.load %arg3[%c0_3, %c0_4] : memref<1x176xf32, #tpu.memory_space<vmem>>, vector<1x176xf32>
    %4 = vector.broadcast %3 : vector<1x176xf32> to vector<16x176xf32>
    %5 = arith.addf %2, %4 : vector<16x176xf32>
    %c0_5 = arith.constant 0 : index
    %c0_6 = arith.constant 0 : index
    %6 = vector.load %arg4[%c0_5, %c0_6] : memref<176x176xf32, #tpu.memory_space<vmem>>, vector<176x176xf32>
    %cst_7 = arith.constant dense<0.000000e+00> : vector<16x176xf32>
    %7 = tpu.matmul %5, %6, %cst_7 {dimension_numbers = #tpu.dot_dimension_numbers<[1], [0], [0], [1], [0, 0, 1, 1], [], []>} : vector<16x176xf32>, vector<176x176xf32>, vector<16x176xf32> -> vector<16x176xf32>
    %8 = arith.subf %5, %7 : vector<16x176xf32>
    %9 = arith.mulf %8, %8 : vector<16x176xf32>
    %c0_8 = arith.constant 0 : index
    %c0_9 = arith.constant 0 : index
    %10 = vector.load %arg4[%c0_8, %c0_9] : memref<176x176xf32, #tpu.memory_space<vmem>>, vector<176x176xf32>
    %cst_10 = arith.constant dense<0.000000e+00> : vector<16x176xf32>
    %11 = tpu.matmul %9, %10, %cst_10 {dimension_numbers = #tpu.dot_dimension_numbers<[1], [0], [0], [1], [0, 0, 1, 1], [], []>} : vector<16x176xf32>, vector<176x176xf32>, vector<16x176xf32> -> vector<16x176xf32>
    %cst_11 = arith.constant 9.99999974E-6 : f32
    %12 = vector.broadcast %cst_11 : f32 to vector<16x176xf32>
    %13 = arith.addf %11, %12 : vector<16x176xf32>
    %14 = math.rsqrt %13 : vector<16x176xf32>
    %15 = arith.mulf %8, %14 : vector<16x176xf32>
    %c0_12 = arith.constant 0 : index
    %c0_13 = arith.constant 0 : index
    %16 = vector.load %arg6[%c0_12, %c0_13] : memref<1x176xf32, #tpu.memory_space<vmem>>, vector<1x176xf32>
    %17 = vector.broadcast %16 : vector<1x176xf32> to vector<16x176xf32>
    %18 = arith.mulf %15, %17 : vector<16x176xf32>
    %c0_14 = arith.constant 0 : index
    %c0_15 = arith.constant 0 : index
    %19 = vector.load %arg7[%c0_14, %c0_15] : memref<1x176xf32, #tpu.memory_space<vmem>>, vector<1x176xf32>
    %20 = vector.broadcast %19 : vector<1x176xf32> to vector<16x176xf32>
    %21 = arith.addf %18, %20 : vector<16x176xf32>
    %c0_16 = arith.constant 0 : index
    %c0_17 = arith.constant 0 : index
    %22 = vector.load %arg5[%c0_16, %c0_17] : memref<1x176xf32, #tpu.memory_space<vmem>>, vector<1x176xf32>
    %cst_18 = arith.constant 5.000000e-01 : f32
    %23 = vector.broadcast %cst_18 : f32 to vector<1x176xf32>
    %24 = arith.cmpf ogt, %22, %23 : vector<1x176xf32>
    %25 = vector.shape_cast %24 : vector<1x176xi1> to vector<1x176xi1>
    %26 = vector.broadcast %25 : vector<1x176xi1> to vector<16x176xi1>
    %27 = arith.select %26, %21, %5 : vector<16x176xi1>, vector<16x176xf32>
    %cst_19 = arith.constant 0.000000e+00 : f32
    %28 = vector.broadcast %cst_19 : f32 to vector<16x176xf32>
    %29 = arith.maximumf %27, %28 : vector<16x176xf32>
    %30 = arith.truncf %29 : vector<16x176xf32> to vector<16x176xbf16>
    %c0_20 = arith.constant 0 : index
    %c0_21 = arith.constant 0 : index
    %31 = vector.load %arg8[%c0_20, %c0_21] : memref<176x64xbf16, #tpu.memory_space<vmem>>, vector<176x64xbf16>
    %cst_22 = arith.constant dense<0.000000e+00> : vector<16x64xf32>
    %32 = tpu.matmul %30, %31, %cst_22 {dimension_numbers = #tpu.dot_dimension_numbers<[1], [0], [0], [1], [0, 0, 1, 1], [], []>} : vector<16x176xbf16>, vector<176x64xbf16>, vector<16x64xf32> -> vector<16x64xf32>
    %c0_23 = arith.constant 0 : index
    %c0_24 = arith.constant 0 : index
    %33 = vector.load %arg9[%c0_23, %c0_24] : memref<1x64xf32, #tpu.memory_space<vmem>>, vector<1x64xf32>
    %34 = vector.broadcast %33 : vector<1x64xf32> to vector<16x64xf32>
    %35 = arith.addf %32, %34 : vector<16x64xf32>
    %cst_25 = arith.constant 0.000000e+00 : f32
    %36 = vector.broadcast %cst_25 : f32 to vector<16x64xf32>
    %37 = arith.maximumf %35, %36 : vector<16x64xf32>
    %38 = arith.truncf %37 : vector<16x64xf32> to vector<16x64xbf16>
    %c0_26 = arith.constant 0 : index
    %c0_27 = arith.constant 0 : index
    %39 = vector.load %arg10[%c0_26, %c0_27] : memref<64x64xbf16, #tpu.memory_space<vmem>>, vector<64x64xbf16>
    %cst_28 = arith.constant dense<0.000000e+00> : vector<16x64xf32>
    %40 = tpu.matmul %38, %39, %cst_28 {dimension_numbers = #tpu.dot_dimension_numbers<[1], [0], [0], [1], [0, 0, 1, 1], [], []>} : vector<16x64xbf16>, vector<64x64xbf16>, vector<16x64xf32> -> vector<16x64xf32>
    %c0_29 = arith.constant 0 : index
    %c0_30 = arith.constant 0 : index
    %41 = vector.load %arg11[%c0_29, %c0_30] : memref<1x64xf32, #tpu.memory_space<vmem>>, vector<1x64xf32>
    %42 = vector.broadcast %41 : vector<1x64xf32> to vector<16x64xf32>
    %43 = arith.addf %40, %42 : vector<16x64xf32>
    %cst_31 = arith.constant 0.000000e+00 : f32
    %44 = vector.broadcast %cst_31 : f32 to vector<16x64xf32>
    %45 = arith.maximumf %43, %44 : vector<16x64xf32>
    %46 = arith.truncf %45 : vector<16x64xf32> to vector<16x64xbf16>
    %c0_32 = arith.constant 0 : index
    %c0_33 = arith.constant 0 : index
    %47 = vector.load %arg12[%c0_32, %c0_33] : memref<64x128xbf16, #tpu.memory_space<vmem>>, vector<64x128xbf16>
    %cst_34 = arith.constant dense<0.000000e+00> : vector<16x128xf32>
    %48 = tpu.matmul %46, %47, %cst_34 {dimension_numbers = #tpu.dot_dimension_numbers<[1], [0], [0], [1], [0, 0, 1, 1], [], []>} : vector<16x64xbf16>, vector<64x128xbf16>, vector<16x128xf32> -> vector<16x128xf32>
    %c0_35 = arith.constant 0 : index
    %c0_36 = arith.constant 0 : index
    %49 = vector.load %arg13[%c0_35, %c0_36] : memref<1x128xf32, #tpu.memory_space<vmem>>, vector<1x128xf32>
    %50 = vector.broadcast %49 : vector<1x128xf32> to vector<16x128xf32>
    %51 = arith.addf %48, %50 : vector<16x128xf32>
    %c0_37 = arith.constant 0 : index
    %c0_38 = arith.constant 0 : index
    %52 = vector.load %arg14[%c0_37, %c0_38] : memref<16x128xf32, #tpu.memory_space<vmem>>, vector<16x128xf32>
    tpu.vector_store %arg14[%c0_37, %c0_38], %51 {strides = array<i32>} : memref<16x128xf32, #tpu.memory_space<vmem>>, vector<16x128xf32>,
    return
  }
  func.func @transform_0(%arg0: i32) -> (i32, i32) {
    %c0_i32 = arith.constant 0 : i32
    %c0_i32_0 = arith.constant 0 : i32
    return %arg0, %c0_i32 : i32, i32
  }
  func.func @transform_1(%arg0: i32) -> (i32, i32) {
    %c0_i32 = arith.constant 0 : i32
    %c0_i32_0 = arith.constant 0 : i32
    %c0_i32_1 = arith.constant 0 : i32
    return %c0_i32, %c0_i32_0 : i32, i32
  }
  func.func @transform_2(%arg0: i32) -> (i32, i32) {
    %c0_i32 = arith.constant 0 : i32
    %c0_i32_0 = arith.constant 0 : i32
    %c0_i32_1 = arith.constant 0 : i32
    return %c0_i32, %c0_i32_0 : i32, i32
  }
  func.func @transform_3(%arg0: i32) -> (i32, i32) {
    %c0_i32 = arith.constant 0 : i32
    %c0_i32_0 = arith.constant 0 : i32
    %c0_i32_1 = arith.constant 0 : i32
    return %c0_i32, %c0_i32_0 : i32, i32
  }
  func.func @transform_4(%arg0: i32) -> (i32, i32) {
    %c0_i32 = arith.constant 0 : i32
    %c0_i32_0 = arith.constant 0 : i32
    %c0_i32_1 = arith.constant 0 : i32
    return %c0_i32, %c0_i32_0 : i32, i32
  }
  func.func @transform_5(%arg0: i32) -> (i32, i32) {
    %c0_i32 = arith.constant 0 : i32
    %c0_i32_0 = arith.constant 0 : i32
    %c0_i32_1 = arith.constant 0 : i32
    return %c0_i32, %c0_i32_0 : i32, i32
  }
  func.func @transform_6(%arg0: i32) -> (i32, i32) {
    %c0_i32 = arith.constant 0 : i32
    %c0_i32_0 = arith.constant 0 : i32
    %c0_i32_1 = arith.constant 0 : i32
    return %c0_i32, %c0_i32_0 : i32, i32
  }
  func.func @transform_7(%arg0: i32) -> (i32, i32) {
    %c0_i32 = arith.constant 0 : i32
    %c0_i32_0 = arith.constant 0 : i32
    %c0_i32_1 = arith.constant 0 : i32
    return %c0_i32, %c0_i32_0 : i32, i32
  }
  func.func @transform_8(%arg0: i32) -> (i32, i32) {
    %c0_i32 = arith.constant 0 : i32
    %c0_i32_0 = arith.constant 0 : i32
    %c0_i32_1 = arith.constant 0 : i32
    return %c0_i32, %c0_i32_0 : i32, i32
  }
  func.func @transform_9(%arg0: i32) -> (i32, i32) {
    %c0_i32 = arith.constant 0 : i32
    %c0_i32_0 = arith.constant 0 : i32
    %c0_i32_1 = arith.constant 0 : i32
    return %c0_i32, %c0_i32_0 : i32, i32
  }
  func.func @transform_10(%arg0: i32) -> (i32, i32) {
    %c0_i32 = arith.constant 0 : i32
    %c0_i32_0 = arith.constant 0 : i32
    %c0_i32_1 = arith.constant 0 : i32
    return %c0_i32, %c0_i32_0 : i32, i32
  }
  func.func @transform_11(%arg0: i32) -> (i32, i32) {
    %c0_i32 = arith.constant 0 : i32
    %c0_i32_0 = arith.constant 0 : i32
    %c0_i32_1 = arith.constant 0 : i32
    return %c0_i32, %c0_i32_0 : i32, i32
  }
  func.func @transform_12(%arg0: i32) -> (i32, i32) {
    %c0_i32 = arith.constant 0 : i32
    %c0_i32_0 = arith.constant 0 : i32
    %c0_i32_1 = arith.constant 0 : i32
    return %c0_i32, %c0_i32_0 : i32, i32
  }
  func.func @transform_13(%arg0: i32) -> (i32, i32) {
    %c0_i32 = arith.constant 0 : i32
    %c0_i32_0 = arith.constant 0 : i32
    return %arg0, %c0_i32 : i32, i32
  }
}

</mosaic_0001>

<llo_original>
// kernel: tpu_custom_call.1
$region0: #{tpu_custom_call.1}
  #allocation0 [shape = 'u32[]', space=smem, size = 0x4, offset = 0x4, fixed_abs, tag = 'smem constant byte address 0x4 - core index']
  #allocation1 [shape = 'u32[72,128]{1,0:T(1,128)}', space=vmem, size = 0x9000, scoped, tag = 'internal scratch']
  %s0 = inlined_call_operand.vmem [shape: bf16[16,60], index: 0, kind: input, shape index: {}]
  %s1 = inlined_call_operand.vmem [shape: bf16[60,176], index: 1, kind: input, shape index: {}]
  %s2 = inlined_call_operand.vmem [shape: f32[1,176], index: 2, kind: input, shape index: {}]
  %s3 = inlined_call_operand.hbm [shape: f32[176,176], index: 3, kind: input, shape index: {}]
  %s4 = inlined_call_operand.vmem [shape: f32[1,176], index: 4, kind: input, shape index: {}]
  %s5 = inlined_call_operand.vmem [shape: f32[1,176], index: 5, kind: input, shape index: {}]
  %s6 = inlined_call_operand.vmem [shape: f32[1,176], index: 6, kind: input, shape index: {}]
  %s7 = inlined_call_operand.vmem [shape: bf16[176,64], index: 7, kind: input, shape index: {}]
  %s8 = inlined_call_operand.vmem [shape: f32[1,64], index: 8, kind: input, shape index: {}]
  %s9 = inlined_call_operand.vmem [shape: bf16[64,64], index: 9, kind: input, shape index: {}]
  %s10 = inlined_call_operand.vmem [shape: f32[1,64], index: 10, kind: input, shape index: {}]
  %s11 = inlined_call_operand.vmem [shape: bf16[64,128], index: 11, kind: input, shape index: {}]
  %s12 = inlined_call_operand.vmem [shape: f32[1,128], index: 12, kind: input, shape index: {}]
  %s13 = inlined_call_operand.hbm [shape: f32[16,128], index: 13, kind: output, shape index: {}]
  %s14 = sld [smem:[#allocation0]]
  $region66: #{tpu_custom_call.1} parent=0
    _
  %s16 = ssub.s32 1, %s14
  %s17 = scalar_select 0, %s16, %s14
  $region1: #{tpu_custom_call.1} parent=0
    #allocation2 [shape = 'u8[180224]{0}', space=vmem, size = 0x2c000, scoped, tag = 'input window, operand 3, single buffered']
    #allocation3 [shape = 's32[1]{0}', space=sflag, size = 0x4, scoped, tag = 'scoped memory for tpu_custom_call.1']
    #allocation4 [shape = 's32[1]{0}', space=sflag, size = 0x4, scoped, tag = 'scoped memory for tpu_custom_call.1']
    #allocation5 [shape = 'u8[8192]{0}', space=vmem, size = 0x2000, scoped, tag = 'output window, operand 0, single buffered']
    %18 = vsyncpa [#allocation3], 0
    %19 = vsyncpa [#allocation4], 0
    // Predicated region
    $region2: #{tpu_custom_call.1} parent=1 // pred_check
      _
    $region3: #{tpu_custom_call.1} parent=1 // pred_check_branch
      %21 = sbr.rel (0) target = $region5
    $region4: #{tpu_custom_call.1} parent=1 // pred_region
      _
    $region5: #{tpu_custom_call.1} parent=1 // pred_fallthru
      _
    // Predicated region
    $region6: #{tpu_custom_call.1} parent=1 // pred_check
      _
    $region7: #{tpu_custom_call.1} parent=1 // pred_check_branch
      %23 = sbr.rel (0) target = $region9
    $region8: #{tpu_custom_call.1} parent=1 // pred_region
      _
    $region9: #{tpu_custom_call.1} parent=1 // pred_fallthru
      _
    // Predicated region
    $region10: #{tpu_custom_call.1} parent=1 // pred_check
      _
    $region11: #{tpu_custom_call.1} parent=1 // pred_check_branch
      %25 = sbr.rel (0) target = $region13
    $region12: #{tpu_custom_call.1} parent=1 // pred_region
      _
    $region13: #{tpu_custom_call.1} parent=1 // pred_fallthru
      _
    // Predicated region
    $region14: #{tpu_custom_call.1} parent=1 // pred_check
      _
    $region15: #{tpu_custom_call.1} parent=1 // pred_check_branch
      %27 = sbr.rel (0) target = $region17
    $region16: #{tpu_custom_call.1} parent=1 // pred_region
      %29 = vsyncadd [#allocation3], 0
      %s30 = sshll.u32 %s3, 4
      %s31 = int_to_ptr.hbm [resolvable:$true] %s30
      %s32 = sshll.u32 [#allocation2], 4
      %s33 = int_to_ptr.vmem [resolvable:$true] %s32
      %38 = dma.hbm_to_vmem [thread:$0]  %s31, 5632, %s33, [#allocation3], 256, 256, 16
    $region17: #{tpu_custom_call.1} parent=1 // pred_fallthru
      _
    // Predicated region
    $region18: #{tpu_custom_call.1} parent=1 // pred_check
      _
    $region19: #{tpu_custom_call.1} parent=1 // pred_check_branch
      %40 = sbr.rel (0) target = $region21
    $region20: #{tpu_custom_call.1} parent=1 // pred_region
      _
    $region21: #{tpu_custom_call.1} parent=1 // pred_fallthru
      _
    // Predicated region
    $region22: #{tpu_custom_call.1} parent=1 // pred_check
      _
    $region23: #{tpu_custom_call.1} parent=1 // pred_check_branch
      %42 = sbr.rel (0) target = $region25
    $region24: #{tpu_custom_call.1} parent=1 // pred_region
      _
    $region25: #{tpu_custom_call.1} parent=1 // pred_fallthru
      _
    // Predicated region
    $region26: #{tpu_custom_call.1} parent=1 // pred_check
      _
    $region27: #{tpu_custom_call.1} parent=1 // pred_check_branch
      %44 = sbr.rel (0) target = $region29
    $region28: #{tpu_custom_call.1} parent=1 // pred_region
      _
    $region29: #{tpu_custom_call.1} parent=1 // pred_fallthru
      _
    // Predicated region
    $region30: #{tpu_custom_call.1} parent=1 // pred_check
      _
    $region31: #{tpu_custom_call.1} parent=1 // pred_check_branch
      %46 = sbr.rel (0) target = $region33
    $region32: #{tpu_custom_call.1} parent=1 // pred_region
      _
    $region33: #{tpu_custom_call.1} parent=1 // pred_fallthru
      _
    // Predicated region
    $region34: #{tpu_custom_call.1} parent=1 // pred_check
      _
    $region35: #{tpu_custom_call.1} parent=1 // pred_check_branch
      %48 = sbr.rel (0) target = $region37
    $region36: #{tpu_custom_call.1} parent=1 // pred_region
      _
    $region37: #{tpu_custom_call.1} parent=1 // pred_fallthru
      _
    // Predicated region
    $region38: #{tpu_custom_call.1} parent=1 // pred_check
      _
    $region39: #{tpu_custom_call.1} parent=1 // pred_check_branch
      %50 = sbr.rel (0) target = $region41
    $region40: #{tpu_custom_call.1} parent=1 // pred_region
      _
    $region41: #{tpu_custom_call.1} parent=1 // pred_fallthru
      _
    // Predicated region
    $region42: #{tpu_custom_call.1} parent=1 // pred_check
      _
    $region43: #{tpu_custom_call.1} parent=1 // pred_check_branch
      %52 = sbr.rel (0) target = $region45
    $region44: #{tpu_custom_call.1} parent=1 // pred_region
      _
    $region45: #{tpu_custom_call.1} parent=1 // pred_fallthru
      _
    // Predicated region
    $region46: #{tpu_custom_call.1} parent=1 // pred_check
      _
    $region47: #{tpu_custom_call.1} parent=1 // pred_check_branch
      %54 = sbr.rel (0) target = $region49
    $region48: #{tpu_custom_call.1} parent=1 // pred_region
      _
    $region49: #{tpu_custom_call.1} parent=1 // pred_fallthru
      _
    // Predicated region
    $region50: #{tpu_custom_call.1} parent=1 // pred_check
      _
    $region51: #{tpu_custom_call.1} parent=1 // pred_check_branch
      %56 = sbr.rel (0) target = $region53
    $region52: #{tpu_custom_call.1} parent=1 // pred_region
      _
    $region53: #{tpu_custom_call.1} parent=1 // pred_fallthru
      _
    // Predicated region
    $region54: #{tpu_custom_call.1} parent=1 // pred_check
      _
    $region55: #{tpu_custom_call.1} parent=1 // pred_check_branch
      %58 = sbr.rel (0) target = $region57
    $region56: #{tpu_custom_call.1} parent=1 // pred_region
      %60 = dma.done [#allocation3], 5632
    $region57: #{tpu_custom_call.1} parent=1 // pred_fallthru
      _
    %v62 = vld [vmem:[%s0] sm:$0xf]
    %v63 = vld [vmem:[%s0 + $0x4] sm:$0xf]
    %v64 = vld [vmem:[%s1] sm:$0xff]
    %v65 = vld [vmem:[%s1 + $0x8] sm:$0xff]
    %v66 = vld [vmem:[%s1 + $0x10] sm:$0xff]
    %v67 = vld [vmem:[%s1 + $0x18] sm:$0xff]
    %v68 = vld [vmem:[%s1 + $0x20] sm:$0xff]
    %v69 = vld [vmem:[%s1 + $0x28] sm:$0xff]
    %v70 = vld [vmem:[%s1 + $0x30] sm:$0xff]
    %v71 = vld [vmem:[%s1 + $0x38] sm:$0x33]
    %v72 = vld [vmem:[%s2] sm:$0x3]
    %v74 = vperm.slane %v72, 0
    %v75 = vperm.slane %v72, 1
    %v80 = vunpack.c.l.b16 %v62
    %v81 = vunpack.c.l.b16 %v63
    %v82 = vpack.c.b16 %v81, %v80
    %v91 = vunpack.c.l.b16 %v64
    %v92 = vunpack.c.h.b16 %v64
    %v93 = vunpack.c.l.b16 %v65
    %v94 = vunpack.c.h.b16 %v65
    %v95 = vunpack.c.l.b16 %v66
    %v96 = vunpack.c.h.b16 %v66
    %v97 = vunpack.c.l.b16 %v67
    %v98 = vunpack.c.h.b16 %v67
    %v99 = vunpack.c.l.b16 %v68
    %v100 = vunpack.c.h.b16 %v68
    %v101 = vunpack.c.l.b16 %v69
    %v102 = vunpack.c.h.b16 %v69
    %v103 = vunpack.c.l.b16 %v70
    %v104 = vunpack.c.h.b16 %v70
    %v105 = vunpack.c.l.b16 %v71
    %v106 = vunpack.c.h.b16 %v71
    %v107 = vpack.c.b16 %v93, %v91
    %v108 = vpack.c.b16 %v94, %v92
    %v109 = vpack.c.b16 %v97, %v95
    %v110 = vpack.c.b16 %v98, %v96
    %v111 = vpack.c.b16 %v101, %v99
    %v112 = vpack.c.b16 %v102, %v100
    %v113 = vpack.c.b16 %v105, %v103
    %v114 = vpack.c.b16 %v106, %v104
    %vm121 = vcmask 490496
    %v123 = vsel %vm121, %v82, 0
    %vm125 = vcmask 1045504
    %v127 = vsel %vm125, %v113, 0
    %v130 = vsel %vm125, %v114, 0
    %132 = vmatpush.bf16.msra.mxu0 0
    %133 = vmatpush.bf16.msra.mxu0 0
    %134 = vmatpush.bf16.msra.mxu0 0
    %135 = vmatpush.bf16.msra.mxu0 0
    %136 = vmatpush.bf16.msra.mxu0 %v127
    %137 = vmatpush.bf16.msra.mxu0 %v111
    %138 = vmatpush.bf16.msra.mxu0 %v109
    %139 = vmatpush.bf16.msra.mxu0 %v107
    %140 = vmatmul.bf16.gmra.mxu0 %v123
    %v141 = vpop.f32.mrf.mxu0
    %v142 = vadd.f32 %v74, %v141
    %v143 = vpop.f32.mrf.mxu0
    %v144 = vadd.f32 %v74, %v143
    %145 = vdwg.mxu0
    %146 = vmatpush.bf16.msra.mxu0 0
    %147 = vmatpush.bf16.msra.mxu0 0
    %148 = vmatpush.bf16.msra.mxu0 0
    %149 = vmatpush.bf16.msra.mxu0 0
    %150 = vmatpush.bf16.msra.mxu0 %v130
    %151 = vmatpush.bf16.msra.mxu0 %v112
    %152 = vmatpush.bf16.msra.mxu0 %v110
    %153 = vmatpush.bf16.msra.mxu0 %v108
    %154 = vmatmul.bf16.gmra.mxu0 %v123
    %v155 = vpop.f32.mrf.mxu0
    %v156 = vadd.f32 %v75, %v155
    %v157 = vpop.f32.mrf.mxu0
    %v158 = vadd.f32 %v75, %v157
    %159 = vdwg.mxu0
    %v160 = vld [vmem:[#allocation2] sm:$0xff]
    %v161 = vld [vmem:[#allocation2 + $0x8] sm:$0xff]
    %v162 = vld [vmem:[#allocation2 + $0x10] sm:$0xff]
    %v163 = vld [vmem:[#allocation2 + $0x18] sm:$0xff]
    %v164 = vld [vmem:[#allocation2 + $0x20] sm:$0xff]
    %v165 = vld [vmem:[#allocation2 + $0x28] sm:$0xff]
    %v166 = vld [vmem:[#allocation2 + $0x30] sm:$0xff]
    %v167 = vld [vmem:[#allocation2 + $0x38] sm:$0xff]
    %v168 = vld [vmem:[#allocation2 + $0x40] sm:$0xff]
    %v169 = vld [vmem:[#allocation2 + $0x48] sm:$0xff]
    %v170 = vld [vmem:[#allocation2 + $0x50] sm:$0xff]
    %v171 = vld [vmem:[#allocation2 + $0x58] sm:$0xff]
    %v172 = vld [vmem:[#allocation2 + $0x60] sm:$0xff]
    %v173 = vld [vmem:[#allocation2 + $0x68] sm:$0xff]
    %v174 = vld [vmem:[#allocation2 + $0x70] sm:$0xff]
    %v175 = vld [vmem:[#allocation2 + $0x78] sm:$0xff]
    %v176 = vld [vmem:[#allocation2 + $0x80] sm:$0xff]
    %v177 = vld [vmem:[#allocation2 + $0x88] sm:$0xff]
    %v178 = vld [vmem:[#allocation2 + $0x90] sm:$0xff]
    %v179 = vld [vmem:[#allocation2 + $0x98] sm:$0xff]
    %v180 = vld [vmem:[#allocation2 + $0xa0] sm:$0xff]
    %v181 = vld [vmem:[#allocation2 + $0xa8] sm:$0xff]
    %v182 = vld [vmem:[#allocation2 + $0xb0] sm:$0xff]
    %v183 = vld [vmem:[#allocation2 + $0xb8] sm:$0xff]
    %v184 = vld [vmem:[#allocation2 + $0xc0] sm:$0xff]
    %v185 = vld [vmem:[#allocation2 + $0xc8] sm:$0xff]
    %v186 = vld [vmem:[#allocation2 + $0xd0] sm:$0xff]
    %v187 = vld [vmem:[#allocation2 + $0xd8] sm:$0xff]
    %v188 = vld [vmem:[#allocation2 + $0xe0] sm:$0xff]
    %v189 = vld [vmem:[#allocation2 + $0xe8] sm:$0xff]
    %v190 = vld [vmem:[#allocation2 + $0xf0] sm:$0xff]
    %v191 = vld [vmem:[#allocation2 + $0xf8] sm:$0xff]
    %v192 = vld [vmem:[#allocation2 + $0x100] sm:$0xff]
    %v193 = vld [vmem:[#allocation2 + $0x108] sm:$0xff]
    %v194 = vld [vmem:[#allocation2 + $0x110] sm:$0xff]
    %v195 = vld [vmem:[#allocation2 + $0x118] sm:$0xff]
    %v196 = vld [vmem:[#allocation2 + $0x120] sm:$0xff]
    %v197 = vld [vmem:[#allocation2 + $0x128] sm:$0xff]
    %v198 = vld [vmem:[#allocation2 + $0x130] sm:$0xff]
    %v199 = vld [vmem:[#allocation2 + $0x138] sm:$0xff]
    %v200 = vld [vmem:[#allocation2 + $0x140] sm:$0xff]
    %v201 = vld [vmem:[#allocation2 + $0x148] sm:$0xff]
    %v202 = vld [vmem:[#allocation2 + $0x150] sm:$0xff]
    %v203 = vld [vmem:[#allocation2 + $0x158] sm:$0xff]
    %vm204 = vcmask 392192
    %v206 = vsel %vm204, %v156, 0
    %v209 = vsel %vm204, %v158, 0
    %211 = vmatpush.msra.mxu0 %v190
    %212 = vmatpush.msra.mxu0 %v188
    %213 = vmatpush.msra.mxu0 %v186
    %214 = vmatpush.msra.mxu0 %v184
    %215 = vmatpush.msra.mxu0 %v182
    %216 = vmatpush.msra.mxu0 %v180
    %217 = vmatpush.msra.mxu0 %v178
    %218 = vmatpush.msra.mxu0 %v176
    %219 = vmatpush.msra.mxu0 %v174
    %220 = vmatpush.msra.mxu0 %v172
    %221 = vmatpush.msra.mxu0 %v170
    %222 = vmatpush.msra.mxu0 %v168
    %223 = vmatpush.msra.mxu0 %v166
    %224 = vmatpush.msra.mxu0 %v164
    %225 = vmatpush.msra.mxu0 %v162
    %226 = vmatpush.msra.mxu0 %v160
    %227 = vmatmul.f32.gmra.mxu0 %v142
    %v228 = vpop.f32.mrf.mxu0
    %v229 = vadd.f32 0.0, %v228
    %230 = vmatmul.f32.gmra.mxu0 %v144
    %v231 = vpop.f32.mrf.mxu0
    %v232 = vadd.f32 0.0, %v231
    %233 = vdwg.mxu0
    %234 = vmatpush.msra.mxu0 0.0
    %235 = vmatpush.msra.mxu0 0.0
    %236 = vmatpush.msra.mxu0 0.0
    %237 = vmatpush.msra.mxu0 0.0
    %238 = vmatpush.msra.mxu0 0.0
    %239 = vmatpush.msra.mxu0 0.0
    %240 = vmatpush.msra.mxu0 0.0
    %241 = vmatpush.msra.mxu0 0.0
    %242 = vmatpush.msra.mxu0 0.0
    %243 = vmatpush.msra.mxu0 0.0
    %244 = vmatpush.msra.mxu0 %v202
    %245 = vmatpush.msra.mxu0 %v200
    %246 = vmatpush.msra.mxu0 %v198
    %247 = vmatpush.msra.mxu0 %v196
    %248 = vmatpush.msra.mxu0 %v194
    %249 = vmatpush.msra.mxu0 %v192
    %250 = vmatmul.f32.gmra.mxu0 %v206
    %v251 = vpop.f32.mrf.mxu0
    %v252 = vadd.f32 %v229, %v251
    %253 = vmatmul.f32.gmra.mxu0 %v209
    %v254 = vpop.f32.mrf.mxu0
    %v255 = vadd.f32 %v232, %v254
    %256 = vdwg.mxu0
    %257 = vmatpush.msra.mxu0 %v191
    %258 = vmatpush.msra.mxu0 %v189
    %259 = vmatpush.msra.mxu0 %v187
    %260 = vmatpush.msra.mxu0 %v185
    %261 = vmatpush.msra.mxu0 %v183
    %262 = vmatpush.msra.mxu0 %v181
    %263 = vmatpush.msra.mxu0 %v179
    %264 = vmatpush.msra.mxu0 %v177
    %265 = vmatpush.msra.mxu0 %v175
    %266 = vmatpush.msra.mxu0 %v173
    %267 = vmatpush.msra.mxu0 %v171
    %268 = vmatpush.msra.mxu0 %v169
    %269 = vmatpush.msra.mxu0 %v167
    %270 = vmatpush.msra.mxu0 %v165
    %271 = vmatpush.msra.mxu0 %v163
    %272 = vmatpush.msra.mxu0 %v161
    %273 = vmatmul.f32.gmra.mxu0 %v142
    %v274 = vpop.f32.mrf.mxu0
    %v275 = vadd.f32 0.0, %v274
    %276 = vmatmul.f32.gmra.mxu0 %v144
    %v277 = vpop.f32.mrf.mxu0
    %v278 = vadd.f32 0.0, %v277
    %279 = vdwg.mxu0
    %280 = vmatpush.msra.mxu0 0.0
    %281 = vmatpush.msra.mxu0 0.0
    %282 = vmatpush.msra.mxu0 0.0
    %283 = vmatpush.msra.mxu0 0.0
    %284 = vmatpush.msra.mxu0 0.0
    %285 = vmatpush.msra.mxu0 0.0
    %286 = vmatpush.msra.mxu0 0.0
    %287 = vmatpush.msra.mxu0 0.0
    %288 = vmatpush.msra.mxu0 0.0
    %289 = vmatpush.msra.mxu0 0.0
    %290 = vmatpush.msra.mxu0 %v203
    %291 = vmatpush.msra.mxu0 %v201
    %292 = vmatpush.msra.mxu0 %v199
    %293 = vmatpush.msra.mxu0 %v197
    %294 = vmatpush.msra.mxu0 %v195
    %295 = vmatpush.msra.mxu0 %v193
    %296 = vmatmul.f32.gmra.mxu0 %v206
    %v297 = vpop.f32.mrf.mxu0
    %v298 = vadd.f32 %v275, %v297
    %299 = vmatmul.f32.gmra.mxu0 %v209
    %v300 = vpop.f32.mrf.mxu0
    %v301 = vadd.f32 %v278, %v300
    %302 = vdwg.mxu0
    %v303 = vsub.f32 %v142, %v252
    %v304 = vsub.f32 %v156, %v298
    %v305 = vsub.f32 %v144, %v255
    %v306 = vsub.f32 %v158, %v301
    %v307 = vmul.f32 %v303, %v303
    %v308 = vmul.f32 %v304, %v304
    %v309 = vmul.f32 %v305, %v305
    %v310 = vmul.f32 %v306, %v306
    %v312 = vsel %vm204, %v308, 0
    %v315 = vsel %vm204, %v310, 0
    %317 = vmatpush.msra.mxu0 %v190
    %318 = vmatpush.msra.mxu0 %v188
    %319 = vmatpush.msra.mxu0 %v186
    %320 = vmatpush.msra.mxu0 %v184
    %321 = vmatpush.msra.mxu0 %v182
    %322 = vmatpush.msra.mxu0 %v180
    %323 = vmatpush.msra.mxu0 %v178
    %324 = vmatpush.msra.mxu0 %v176
    %325 = vmatpush.msra.mxu0 %v174
    %326 = vmatpush.msra.mxu0 %v172
    %327 = vmatpush.msra.mxu0 %v170
    %328 = vmatpush.msra.mxu0 %v168
    %329 = vmatpush.msra.mxu0 %v166
    %330 = vmatpush.msra.mxu0 %v164
    %331 = vmatpush.msra.mxu0 %v162
    %332 = vmatpush.msra.mxu0 %v160
    %333 = vmatmul.f32.gmra.mxu0 %v307
    %v334 = vpop.f32.mrf.mxu0
    %v335 = vadd.f32 1e-05, %v334
    %336 = vmatmul.f32.gmra.mxu0 %v309
    %v337 = vpop.f32.mrf.mxu0
    %v338 = vadd.f32 1e-05, %v337
    %339 = vdwg.mxu0
    %340 = vmatpush.msra.mxu0 0.0
    %341 = vmatpush.msra.mxu0 0.0
    %342 = vmatpush.msra.mxu0 0.0
    %343 = vmatpush.msra.mxu0 0.0
    %344 = vmatpush.msra.mxu0 0.0
    %345 = vmatpush.msra.mxu0 0.0
    %346 = vmatpush.msra.mxu0 0.0
    %347 = vmatpush.msra.mxu0 0.0
    %348 = vmatpush.msra.mxu0 0.0
    %349 = vmatpush.msra.mxu0 0.0
    %350 = vmatpush.msra.mxu0 %v202
    %351 = vmatpush.msra.mxu0 %v200
    %352 = vmatpush.msra.mxu0 %v198
    %353 = vmatpush.msra.mxu0 %v196
    %354 = vmatpush.msra.mxu0 %v194
    %355 = vmatpush.msra.mxu0 %v192
    %356 = vmatmul.f32.gmra.mxu0 %v312
    %v357 = vpop.f32.mrf.mxu0
    %v358 = vadd.f32 %v335, %v357
    %359 = vmatmul.f32.gmra.mxu0 %v315
    %v360 = vpop.f32.mrf.mxu0
    %v361 = vadd.f32 %v338, %v360
    %362 = vdwg.mxu0
    %363 = vmatpush.msra.mxu0 %v191
    %364 = vmatpush.msra.mxu0 %v189
    %365 = vmatpush.msra.mxu0 %v187
    %366 = vmatpush.msra.mxu0 %v185
    %367 = vmatpush.msra.mxu0 %v183
    %368 = vmatpush.msra.mxu0 %v181
    %369 = vmatpush.msra.mxu0 %v179
    %370 = vmatpush.msra.mxu0 %v177
    %371 = vmatpush.msra.mxu0 %v175
    %372 = vmatpush.msra.mxu0 %v173
    %373 = vmatpush.msra.mxu0 %v171
    %374 = vmatpush.msra.mxu0 %v169
    %375 = vmatpush.msra.mxu0 %v167
    %376 = vmatpush.msra.mxu0 %v165
    %377 = vmatpush.msra.mxu0 %v163
    %378 = vmatpush.msra.mxu0 %v161
    %379 = vmatmul.f32.gmra.mxu0 %v307
    %v380 = vpop.f32.mrf.mxu0
    %v381 = vadd.f32 1e-05, %v380
    %382 = vmatmul.f32.gmra.mxu0 %v309
    %v383 = vpop.f32.mrf.mxu0
    %v384 = vadd.f32 1e-05, %v383
    %385 = vdwg.mxu0
    %386 = vmatpush.msra.mxu0 0.0
    %387 = vmatpush.msra.mxu0 0.0
    %388 = vmatpush.msra.mxu0 0.0
    %389 = vmatpush.msra.mxu0 0.0
    %390 = vmatpush.msra.mxu0 0.0
    %391 = vmatpush.msra.mxu0 0.0
    %392 = vmatpush.msra.mxu0 0.0
    %393 = vmatpush.msra.mxu0 0.0
    %394 = vmatpush.msra.mxu0 0.0
    %395 = vmatpush.msra.mxu0 0.0
    %396 = vmatpush.msra.mxu0 %v203
    %397 = vmatpush.msra.mxu0 %v201
    %398 = vmatpush.msra.mxu0 %v199
    %399 = vmatpush.msra.mxu0 %v197
    %400 = vmatpush.msra.mxu0 %v195
    %401 = vmatpush.msra.mxu0 %v193
    %402 = vmatmul.f32.gmra.mxu0 %v312
    %v403 = vpop.f32.mrf.mxu0
    %v404 = vadd.f32 %v381, %v403
    %405 = vmatmul.f32.gmra.mxu0 %v315
    %v406 = vpop.f32.mrf.mxu0
    %v407 = vadd.f32 %v384, %v406
    %408 = vdwg.mxu0
    %v409 = vrsqrt.pop %v358
    %v410 = vmul.f32 %v409, %v358
    %v411 = vmul.f32 %v410, %v409
    %v412 = vmul.f32 0.5, %v411
    %v413 = vsub.f32 1.5, %v412
    %v414 = vmul.f32 %v409, %v413
    %vm415 = vweird.f32 %v358
    %vm416 = vweird.f32 %v409
    %vm417 = vmor %vm415, %vm416
    %v418 = vsel %vm417, %v409, %v414
    %v419 = vrsqrt.pop %v404
    %v420 = vmul.f32 %v419, %v404
    %v421 = vmul.f32 %v420, %v419
    %v422 = vmul.f32 0.5, %v421
    %v423 = vsub.f32 1.5, %v422
    %v424 = vmul.f32 %v419, %v423
    %vm425 = vweird.f32 %v404
    %vm426 = vweird.f32 %v419
    %vm427 = vmor %vm425, %vm426
    %v428 = vsel %vm427, %v419, %v424
    %v429 = vrsqrt.pop %v361
    %v430 = vmul.f32 %v429, %v361
    %v431 = vmul.f32 %v430, %v429
    %v432 = vmul.f32 0.5, %v431
    %v433 = vsub.f32 1.5, %v432
    %v434 = vmul.f32 %v429, %v433
    %vm435 = vweird.f32 %v361
    %vm436 = vweird.f32 %v429
    %vm437 = vmor %vm435, %vm436
    %v438 = vsel %vm437, %v429, %v434
    %v439 = vrsqrt.pop %v407
    %v440 = vmul.f32 %v439, %v407
    %v441 = vmul.f32 %v440, %v439
    %v442 = vmul.f32 0.5, %v441
    %v443 = vsub.f32 1.5, %v442
    %v444 = vmul.f32 %v439, %v443
    %vm445 = vweird.f32 %v407
    %vm446 = vweird.f32 %v439
    %vm447 = vmor %vm445, %vm446
    %v448 = vsel %vm447, %v439, %v444
    %v449 = vmul.f32 %v303, %v418
    %v450 = vmul.f32 %v304, %v428
    %v451 = vmul.f32 %v305, %v438
    %v452 = vmul.f32 %v306, %v448
    %v453 = vld [vmem:[%s5] sm:$0x3]
    %v455 = vperm.slane %v453, 0
    %v456 = vperm.slane %v453, 1
    %v459 = vmul.f32 %v449, %v455
    %v460 = vmul.f32 %v450, %v456
    %v461 = vmul.f32 %v451, %v455
    %v462 = vmul.f32 %v452, %v456
    %v463 = vld [vmem:[%s6] sm:$0x3]
    %v465 = vperm.slane %v463, 0
    %v466 = vperm.slane %v463, 1
    %v469 = vadd.f32 %v459, %v465
    %v470 = vadd.f32 %v460, %v466
    %v471 = vadd.f32 %v461, %v465
    %v472 = vadd.f32 %v462, %v466
    %v473 = vld [vmem:[%s4] sm:$0x3]
    %vm474 = vcmp.gt.f32.partialorder %v473, 0.5
    %v475 = vsel %vm474, 1, 0
    %v476 = vperm.slane %v475, 0
    %v477 = vperm.slane %v475, 1
    %vm478 = vcmp.eq.s32.totalorder %v476, 1
    %vm479 = vcmp.eq.s32.totalorder %v477, 1
    %v480 = vsel %vm478, %v469, %v142
    %v481 = vsel %vm479, %v470, %v156
    %v482 = vsel %vm478, %v471, %v144
    %v483 = vsel %vm479, %v472, %v158
    %v484 = vmax.f32 %v480, 0.0
    %v485 = vmax.f32 %v481, 0.0
    %v486 = vmax.f32 %v482, 0.0
    %v487 = vmax.f32 %v483, 0.0
    %v488 = vpack.c.bf16 %v486, %v484
    %v489 = vpack.c.bf16 %v487, %v485
    %v490 = vld [vmem:[%s7] sm:$0xf]
    %v491 = vld [vmem:[%s7 + $0x4] sm:$0xf]
    %v492 = vld [vmem:[%s7 + $0x8] sm:$0xf]
    %v493 = vld [vmem:[%s7 + $0xc] sm:$0xf]
    %v494 = vld [vmem:[%s7 + $0x10] sm:$0xf]
    %v495 = vld [vmem:[%s7 + $0x14] sm:$0xf]
    %v496 = vld [vmem:[%s7 + $0x18] sm:$0xf]
    %v497 = vld [vmem:[%s7 + $0x1c] sm:$0xf]
    %v498 = vld [vmem:[%s7 + $0x20] sm:$0xf]
    %v499 = vld [vmem:[%s7 + $0x24] sm:$0xf]
    %v500 = vld [vmem:[%s7 + $0x28] sm:$0xf]
    %v501 = vld [vmem:[%s7 + $0x2c] sm:$0xf]
    %v502 = vld [vmem:[%s7 + $0x30] sm:$0xf]
    %v503 = vld [vmem:[%s7 + $0x34] sm:$0xf]
    %v504 = vld [vmem:[%s7 + $0x38] sm:$0xf]
    %v505 = vld [vmem:[%s7 + $0x3c] sm:$0xf]
    %v506 = vld [vmem:[%s7 + $0x40] sm:$0xf]
    %v507 = vld [vmem:[%s7 + $0x44] sm:$0xf]
    %v508 = vld [vmem:[%s7 + $0x48] sm:$0xf]
    %v509 = vld [vmem:[%s7 + $0x4c] sm:$0xf]
    %v510 = vld [vmem:[%s7 + $0x50] sm:$0xf]
    %v511 = vld [vmem:[%s7 + $0x54] sm:$0xf]
    %v512 = vld [vmem:[%s8] sm:$0x1]
    %v514 = vperm.slane %v512, 0
    %v538 = vunpack.c.l.b16 %v490
    %v539 = vunpack.c.l.b16 %v491
    %v540 = vunpack.c.l.b16 %v492
    %v541 = vunpack.c.l.b16 %v493
    %v542 = vunpack.c.l.b16 %v494
    %v543 = vunpack.c.l.b16 %v495
    %v544 = vunpack.c.l.b16 %v496
    %v545 = vunpack.c.l.b16 %v497
    %v546 = vunpack.c.l.b16 %v498
    %v547 = vunpack.c.l.b16 %v499
    %v548 = vunpack.c.l.b16 %v500
    %v549 = vunpack.c.l.b16 %v501
    %v550 = vunpack.c.l.b16 %v502
    %v551 = vunpack.c.l.b16 %v503
    %v552 = vunpack.c.l.b16 %v504
    %v553 = vunpack.c.l.b16 %v505
    %v554 = vunpack.c.l.b16 %v506
    %v555 = vunpack.c.l.b16 %v507
    %v556 = vunpack.c.l.b16 %v508
    %v557 = vunpack.c.l.b16 %v509
    %v558 = vunpack.c.l.b16 %v510
    %v559 = vunpack.c.l.b16 %v511
    %v560 = vpack.c.b16 %v539, %v538
    %v561 = vpack.c.b16 %v541, %v540
    %v562 = vpack.c.b16 %v543, %v542
    %v563 = vpack.c.b16 %v545, %v544
    %v564 = vpack.c.b16 %v547, %v546
    %v565 = vpack.c.b16 %v549, %v548
    %v566 = vpack.c.b16 %v551, %v550
    %v567 = vpack.c.b16 %v553, %v552
    %v568 = vpack.c.b16 %v555, %v554
    %v569 = vpack.c.b16 %v557, %v556
    %v570 = vpack.c.b16 %v559, %v558
    %v583 = vsel %vm204, %v489, 0
    %585 = vmatpush.bf16.msra.mxu0 %v567
    %586 = vmatpush.bf16.msra.mxu0 %v566
    %587 = vmatpush.bf16.msra.mxu0 %v565
    %588 = vmatpush.bf16.msra.mxu0 %v564
    %589 = vmatpush.bf16.msra.mxu0 %v563
    %590 = vmatpush.bf16.msra.mxu0 %v562
    %591 = vmatpush.bf16.msra.mxu0 %v561
    %592 = vmatpush.bf16.msra.mxu0 %v560
    %593 = vmatmul.bf16.gmra.mxu0 %v488
    %v594 = vpop.f32.mrf.mxu0
    %v595 = vadd.f32 %v514, %v594
    %v596 = vpop.f32.mrf.mxu0
    %v597 = vadd.f32 %v514, %v596
    %598 = vdwg.mxu0
    %599 = vmatpush.bf16.msra.mxu0 0
    %600 = vmatpush.bf16.msra.mxu0 0
    %601 = vmatpush.bf16.msra.mxu0 0
    %602 = vmatpush.bf16.msra.mxu0 0
    %603 = vmatpush.bf16.msra.mxu0 0
    %604 = vmatpush.bf16.msra.mxu0 %v570
    %605 = vmatpush.bf16.msra.mxu0 %v569
    %606 = vmatpush.bf16.msra.mxu0 %v568
    %607 = vmatmul.bf16.gmra.mxu0 %v583
    %v608 = vpop.f32.mrf.mxu0
    %v609 = vadd.f32 %v595, %v608
    %v610 = vpop.f32.mrf.mxu0
    %v611 = vadd.f32 %v597, %v610
    %612 = vdwg.mxu0
    %v613 = vmax.f32 %v609, 0.0
    %v614 = vmax.f32 %v611, 0.0
    %v615 = vpack.c.bf16 %v614, %v613
    %v616 = vld [vmem:[%s9] sm:$0xf]
    %v617 = vld [vmem:[%s9 + $0x4] sm:$0xf]
    %v618 = vld [vmem:[%s9 + $0x8] sm:$0xf]
    %v619 = vld [vmem:[%s9 + $0xc] sm:$0xf]
    %v620 = vld [vmem:[%s9 + $0x10] sm:$0xf]
    %v621 = vld [vmem:[%s9 + $0x14] sm:$0xf]
    %v622 = vld [vmem:[%s9 + $0x18] sm:$0xf]
    %v623 = vld [vmem:[%s9 + $0x1c] sm:$0xf]
    %v624 = vld [vmem:[%s10] sm:$0x1]
    %v626 = vperm.slane %v624, 0
    %v636 = vunpack.c.l.b16 %v616
    %v637 = vunpack.c.l.b16 %v617
    %v638 = vunpack.c.l.b16 %v618
    %v639 = vunpack.c.l.b16 %v619
    %v640 = vunpack.c.l.b16 %v620
    %v641 = vunpack.c.l.b16 %v621
    %v642 = vunpack.c.l.b16 %v622
    %v643 = vunpack.c.l.b16 %v623
    %v644 = vpack.c.b16 %v637, %v636
    %v645 = vpack.c.b16 %v639, %v638
    %v646 = vpack.c.b16 %v641, %v640
    %v647 = vpack.c.b16 %v643, %v642
    %vm652 = vcmask 523264
    %v654 = vsel %vm652, %v615, 0
    %656 = vmatpush.bf16.msra.mxu0 0
    %657 = vmatpush.bf16.msra.mxu0 0
    %658 = vmatpush.bf16.msra.mxu0 0
    %659 = vmatpush.bf16.msra.mxu0 0
    %660 = vmatpush.bf16.msra.mxu0 %v647
    %661 = vmatpush.bf16.msra.mxu0 %v646
    %662 = vmatpush.bf16.msra.mxu0 %v645
    %663 = vmatpush.bf16.msra.mxu0 %v644
    %664 = vmatmul.bf16.gmra.mxu0 %v654
    %v665 = vpop.f32.mrf.mxu0
    %v666 = vadd.f32 %v626, %v665
    %v667 = vpop.f32.mrf.mxu0
    %v668 = vadd.f32 %v626, %v667
    %669 = vdwg.mxu0
    %v670 = vmax.f32 %v666, 0.0
    %v671 = vmax.f32 %v668, 0.0
    %v672 = vpack.c.bf16 %v671, %v670
    %v673 = vld [vmem:[%s11] sm:$0xf]
    %v674 = vld [vmem:[%s11 + $0x4] sm:$0xf]
    %v675 = vld [vmem:[%s11 + $0x8] sm:$0xf]
    %v676 = vld [vmem:[%s11 + $0xc] sm:$0xf]
    %v677 = vld [vmem:[%s11 + $0x10] sm:$0xf]
    %v678 = vld [vmem:[%s11 + $0x14] sm:$0xf]
    %v679 = vld [vmem:[%s11 + $0x18] sm:$0xf]
    %v680 = vld [vmem:[%s11 + $0x1c] sm:$0xf]
    %v681 = vld [vmem:[%s12] sm:$0x1]
    %v683 = vperm.slane %v681, 0
    %v693 = vunpack.c.l.b16 %v673
    %v694 = vunpack.c.l.b16 %v674
    %v695 = vunpack.c.l.b16 %v675
    %v696 = vunpack.c.l.b16 %v676
    %v697 = vunpack.c.l.b16 %v677
    %v698 = vunpack.c.l.b16 %v678
    %v699 = vunpack.c.l.b16 %v679
    %v700 = vunpack.c.l.b16 %v680
    %v701 = vpack.c.b16 %v694, %v693
    %v702 = vpack.c.b16 %v696, %v695
    %v703 = vpack.c.b16 %v698, %v697
    %v704 = vpack.c.b16 %v700, %v699
    %v710 = vsel %vm652, %v672, 0
    %712 = vmatpush.bf16.msra.mxu0 0
    %713 = vmatpush.bf16.msra.mxu0 0
    %714 = vmatpush.bf16.msra.mxu0 0
    %715 = vmatpush.bf16.msra.mxu0 0
    %716 = vmatpush.bf16.msra.mxu0 %v704
    %717 = vmatpush.bf16.msra.mxu0 %v703
    %718 = vmatpush.bf16.msra.mxu0 %v702
    %719 = vmatpush.bf16.msra.mxu0 %v701
    %720 = vmatmul.bf16.gmra.mxu0 %v710
    %v721 = vpop.f32.mrf.mxu0
    %v722 = vadd.f32 %v683, %v721
    %v723 = vpop.f32.mrf.mxu0
    %v724 = vadd.f32 %v683, %v723
    %725 = vdwg.mxu0
    %726 = vst [vmem:[#allocation5] sm:$0xff] %v722
    %727 = vst [vmem:[#allocation5 + $0x8] sm:$0xff] %v724
    // Predicated region
    $region58: #{tpu_custom_call.1} parent=1 // pred_check
      _
    $region59: #{tpu_custom_call.1} parent=1 // pred_check_branch
      %729 = sbr.rel (0) target = $region61
    $region60: #{tpu_custom_call.1} parent=1 // pred_region
      %731 = vsyncadd [#allocation4], 0
      %s732 = sshll.u32 [#allocation5], 4
      %s733 = int_to_ptr.vmem [resolvable:$true] %s732
      %s734 = sshll.u32 %s13, 4
      %s735 = int_to_ptr.hbm [resolvable:$true] %s734
      %740 = dma.vmem_to_hbm [thread:$0]  %s733, 256, %s735, [#allocation4], 128, 128, 8
    $region61: #{tpu_custom_call.1} parent=1 // pred_fallthru
      _
    // Predicated region
    $region62: #{tpu_custom_call.1} parent=1 // pred_check
      _
    $region63: #{tpu_custom_call.1} parent=1 // pred_check_branch
      %742 = sbr.rel (0) target = $region65
    $region64: #{tpu_custom_call.1} parent=1 // pred_region
      %744 = dma.done [#allocation4], 256
    $region65: #{tpu_custom_call.1} parent=1 // pred_fallthru
      _
    %745 = vsyncpa [#allocation3], 1
    %746 = vsyncpa [#allocation4], 1

</llo_original>
